<compile_context>
chip_gen: v6e
topology: v6e:2x2x1
jax: 0.10.0
libtpu: 0.0.40
codegen_flags: <defaults>
</compile_context>

<pallas_src>
import functools

import numpy as np
import jax
import jax.numpy as jnp
from jax import lax
from jax.experimental import pallas as pl
from jax.experimental.pallas import tpu as pltpu


def _round_up(x, m):
    return ((x + m - 1) // m) * m


# ---------------------------------------------------------------------------
# Kernel A: pairwise squared distances (MXU Gram form) + multi-head xent.
# Runs once; logits are NOT resident during the triplet grid.
# ---------------------------------------------------------------------------
def _prep_kernel(tgt_ref,        # [H*B, 1] int32 targets (tiled per head)
                 emb_ref,        # [B_pad, D] embeddings, native dtype
                 logits_ref,     # [H*B, C] classifier logits, native dtype
                 d2_ref,         # out: [B_pad, B_pad] f32 squared distances
                 xent_ref):      # out: [1, 1] f32 mean cross-entropy
    emb = emb_ref[...]                                    # native dtype -> MXU
    gram = lax.dot_general(emb, emb, (((1,), (1,)), ((), ())),
                           preferred_element_type=jnp.float32)       # [B, B]
    emb_f32 = emb.astype(jnp.float32)
    sq = emb_f32 * emb_f32                                # [B, D]
    sq_row = jnp.sum(sq, axis=1, keepdims=True)           # [B, 1] ||e_i||^2
    ones_row = jnp.ones((1, sq.shape[1]), jnp.float32)
    sq_col = lax.dot_general(ones_row, sq, (((1,), (1,)), ((), ())),
                             preferred_element_type=jnp.float32)     # [1, B]
    # clamp at 0: cancellation in the Gram form can go slightly negative
    d2_ref[...] = jnp.maximum(sq_row + sq_col - 2.0 * gram, 0.0)

    # ---- softmax cross-entropy over all heads (mean over H*B rows) ---------
    logits = logits_ref[...].astype(jnp.float32)          # [H*B, C]
    hb, c = logits.shape
    cls_ids = lax.broadcasted_iota(jnp.int32, (hb, c), 1)
    onehot = (cls_ids == tgt_ref[...]).astype(jnp.float32)
    m = jnp.max(logits, axis=-1, keepdims=True)
    lse = jnp.log(jnp.sum(jnp.exp(logits - m), axis=-1, keepdims=True)) + m
    correct = jnp.sum(logits * onehot, axis=-1, keepdims=True)
    # mean over (heads x batch) == per-head batch mean averaged over heads
    # (every head shares the same batch).
    xent_ref[...] = jnp.sum(lse - correct, axis=0, keepdims=True) * (1.0 / hb)


# ---------------------------------------------------------------------------
# Kernel B: per-triplet squared hinge, gridded over lane-dense triplet tiles.
# ---------------------------------------------------------------------------
def _triplet_kernel(meta_ref,    # SMEM scalar prefetch: [1] int32 n_valid
                    idx_ref,     # [3, t_tile] int32 (anchor / pos / neg rows)
                    d2_ref,      # [B_pad, B_pad] f32 squared distances
                    out_ref,     # [1, t_tile] f32 per-triplet squared hinge
                    *, margin):
    n_pts = d2_ref.shape[0]
    t_tile = idx_ref.shape[1]
    nv = meta_ref[0]                                      # valid triplet count

    a_row = idx_ref[0:1, :]                               # [1, t_tile]
    p_row = idx_ref[1:2, :]
    n_row = idx_ref[2:3, :]

    row_ids = lax.broadcasted_iota(jnp.int32, (n_pts, t_tile), 0)
    sel_a = (row_ids == a_row).astype(jnp.float32)        # [B, t_tile] one-hot
    # fused +pos / -neg selection: one multiply + one reduce instead of two
    sel_pn = ((row_ids == p_row).astype(jnp.float32)
              - (row_ids == n_row).astype(jnp.float32))   # [B, t_tile]

    # column t of cols_a is D2[:, a_t]  (MXU)
    cols_a = jnp.dot(d2_ref[...], sel_a,
                     preferred_element_type=jnp.float32)            # [B, t_tile]
    # d_diff[t] = D2[p_t, a_t] - D2[n_t, a_t] = d_ap - d_an
    d_diff = jnp.sum(cols_a * sel_pn, axis=0, keepdims=True)        # [1, t_tile]

    lane = lax.broadcasted_iota(jnp.int32, (1, t_tile), 1)
    valid = ((pl.program_id(0) * t_tile + lane) < nv).astype(jnp.float32)
    hinge = jnp.maximum(d_diff + margin, 0.0) * valid     # relu; padded -> 0
    out_ref[...] = hinge * hinge                          # lane-dense store


def xent_triplet_loss_squa(embedding_classify, embedding, target, triplets,
                           margin, n_class, *, t_tile=512):
    """embedding_classify: list of [B, C] logits; embedding: [B, D];
       target: [B] int; triplets: [T, 3] int (anchor, positive, negative)."""
    B, D = embedding.shape
    H = len(embedding_classify)
    C = n_class

    # Pad the point count to a sublane multiple; padded rows are zero and are
    # never referenced by any triplet index.
    b_pad = _round_up(max(B, 8), 8)
    emb_p = embedding
    if b_pad != B:
        emb_p = jnp.pad(embedding, ((0, b_pad - B), (0, 0)))

    # The triplet axis lives on lanes -> tile must be a multiple of 128.
    t_tile = max(_round_up(int(t_tile), 128), 128)
    T = int(triplets.shape[0])
    num_tiles = max((T + t_tile - 1) // t_tile, 1)
    t_pad = num_tiles * t_tile

    idx = jnp.zeros((3, t_pad), dtype=jnp.int32)          # [anchor; pos; neg]
    if T > 0:
        idx = idx.at[:, :T].set(jnp.asarray(triplets, jnp.int32).T)

    # Native-dtype logits (no f32 pre-cast); tiny int32 targets instead of a
    # dense one-hot.
    logits2d = jnp.concatenate(list(embedding_classify), axis=0)     # [H*B, C]
    tgt2d = jnp.tile(jnp.asarray(target, jnp.int32).reshape(B, 1), (H, 1))
    HB = H * B

    # ---- call A: D2 + xent (logits resident only here) ----------------------
    d2, xent = pl.pallas_call(
        _prep_kernel,
        out_shape=(jax.ShapeDtypeStruct((b_pad, b_pad), jnp.float32),
                   jax.ShapeDtypeStruct((1, 1), jnp.float32)),
        grid_spec=pltpu.PrefetchScalarGridSpec(
            num_scalar_prefetch=0,
            grid=(1,),
            in_specs=[
                pl.BlockSpec((HB, 1), lambda i: (0, 0)),       # targets
                pl.BlockSpec((b_pad, D), lambda i: (0, 0)),    # embedding
                pl.BlockSpec((HB, C), lambda i: (0, 0)),       # logits
            ],
            out_specs=(
                pl.BlockSpec((b_pad, b_pad), lambda i: (0, 0)),
                pl.BlockSpec((1, 1), lambda i: (0, 0)),
            ),
        ),
        compiler_params=pltpu.CompilerParams(
            dimension_semantics=("arbitrary",),
            vmem_limit_bytes=32 * 1024 * 1024,
        ),
    )(tgt2d, emb_p, logits2d)

    # ---- call B: per-triplet squared hinge, parallel over tiles -------------
    meta = jnp.array([T], dtype=jnp.int32)
    parts = pl.pallas_call(
        functools.partial(_triplet_kernel, margin=float(margin)),
        out_shape=jax.ShapeDtypeStruct((1, t_pad), jnp.float32),
        grid_spec=pltpu.PrefetchScalarGridSpec(
            num_scalar_prefetch=1,
            grid=(num_tiles,),
            in_specs=[
                pl.BlockSpec((3, t_tile), lambda i, meta: (0, i)),      # idx
                pl.BlockSpec((b_pad, b_pad), lambda i, meta: (0, 0)),   # D2
            ],
            out_specs=pl.BlockSpec((1, t_tile), lambda i, meta: (0, i)),
        ),
        compiler_params=pltpu.CompilerParams(
            # Independent tiles writing disjoint output blocks -> shards the
            # dominant loop across both v7x TensorCores (no-op on v5e/v6e).
            dimension_semantics=("parallel",),
            # Plenty for D2 + one tile; raise on v5e/v6e (128 MiB VMEM) for
            # much larger B / t_tile, keep <= ~48 MiB on v7x.
            vmem_limit_bytes=32 * 1024 * 1024,
        ),
    )(meta, idx, d2)

    denom = float(max(T, 1))                     # T == 0 -> inter_loss == 0
    inter = jnp.sum(parts) / denom
    return xent[0, 0] + inter


def _all_triplets(target_np):
    """Deterministic all-triplets selector (stand-in for triplet_selector)."""
    B = len(target_np)
    trips = []
    for a in range(B):
        for p in range(B):
            if p == a or target_np[p] != target_np[a]:
                continue
            for n in range(B):
                if target_np[n] != target_np[a]:
                    trips.append((a, p, n))
    return np.asarray(trips, dtype=np.int32).reshape(-1, 3)


def _reference(embedding_classify, embedding, target, triplets, margin):
    if triplets.shape[0] > 0:
        t = jnp.asarray(triplets)
        anc = embedding[t[:, 0]]
        pos = embedding[t[:, 1]]
        neg = embedding[t[:, 2]]
        ap = jnp.sum((anc - pos) ** 2, axis=1)
        an = jnp.sum((anc - neg) ** 2, axis=1)
        inter = jnp.sum(jnp.maximum(ap - an + margin, 0.0) ** 2) / t.shape[0]
    else:
        inter = jnp.float32(0.0)
    xents = []
    for lg in embedding_classify:
        logp = jax.nn.log_softmax(lg.astype(jnp.float32), axis=-1)
        xents.append(-jnp.mean(logp[jnp.arange(lg.shape[0]), target]))
    xent = sum(xents) / len(xents)
    return xent + inter


if __name__ == "__main__":
    B, D, C, H = 16, 32, 4, 2     # batch, embed dim, n_class, classifier heads
    margin = 0.3

    key = jax.random.PRNGKey(0)
    k_emb, k_cls = jax.random.split(key, 2)
    embedding = jax.random.normal(k_emb, (B, D), dtype=jnp.float32)
    embedding_classify = [
        jax.random.normal(k, (B, C), dtype=jnp.float32)
        for k in jax.random.split(k_cls, H)
    ]
    target_np = np.repeat(np.arange(4, dtype=np.int32), 4)   # 4 classes x 4
    target = jnp.asarray(target_np)
    triplets = jnp.asarray(_all_triplets(target_np))         # [576, 3]

    # t_tile=128 so the toy run exercises multi-tile "parallel" partial sums
    # plus valid-count masking (576 triplets -> 5 tiles of 128, 64 padded).
    loss = xent_triplet_loss_squa(embedding_classify, embedding, target,
                                  triplets, margin, C, t_tile=128)
    jax.block_until_ready(loss)
    ref = _reference(embedding_classify, embedding, target,
                     np.asarray(triplets), margin)
    np.testing.assert_allclose(np.asarray(loss), np.asarray(ref),
                               rtol=5e-4, atol=1e-3)

    # "no triplets in this batch" branch: inter loss must be exactly 0
    empty = jnp.zeros((0, 3), dtype=jnp.int32)
    loss0 = xent_triplet_loss_squa(embedding_classify, embedding, target,
                                   empty, margin, C, t_tile=128)
    jax.block_until_ready(loss0)
    ref0 = _reference(embedding_classify, embedding, target,
                      np.zeros((0, 3), dtype=np.int32), margin)
    np.testing.assert_allclose(np.asarray(loss0), np.asarray(ref0),
                               rtol=5e-4, atol=1e-3)

    print("KERNEL_OK")
</pallas_src>

<mosaic_0001>
module attributes {stable_mosaic.version = 11 : i64} {
  func.func @_prep_kernel(%arg0: i32, %arg1: memref<32x1xi32, #tpu.memory_space<vmem>>, %arg2: memref<16x32xf32, #tpu.memory_space<vmem>>, %arg3: memref<32x4xf32, #tpu.memory_space<vmem>>, %arg4: memref<16x16xf32, #tpu.memory_space<vmem>>, %arg5: memref<1x1xf32, #tpu.memory_space<vmem>>) attributes {dimension_semantics = [#tpu.dimension_semantics<arbitrary>], iteration_bounds = array<i64: 1>, scalar_prefetch = 0 : i64, scratch_operands = 0 : i64, tpu.core_type = #tpu.core_type<tc>, window_params = [{pipeline_mode = #tpu.pipeline_mode<synchronous>, transform_indices = @transform_0, window_bounds = array<i64: 32, 1>}, {pipeline_mode = #tpu.pipeline_mode<synchronous>, transform_indices = @transform_1, window_bounds = array<i64: 16, 32>}, {pipeline_mode = #tpu.pipeline_mode<synchronous>, transform_indices = @transform_2, window_bounds = array<i64: 32, 4>}, {pipeline_mode = #tpu.pipeline_mode<synchronous>, transform_indices = @transform_3, window_bounds = array<i64: 16, 16>}, {pipeline_mode = #tpu.pipeline_mode<synchronous>, transform_indices = @transform_4, window_bounds = array<i64: 1, 1>}]} {
    %c0 = arith.constant 0 : index
    %c0_0 = arith.constant 0 : index
    %0 = vector.load %arg2[%c0, %c0_0] : memref<16x32xf32, #tpu.memory_space<vmem>>, vector<16x32xf32>
    %cst = arith.constant dense<0.000000e+00> : vector<16x16xf32>
    %1 = tpu.matmul %0, %0, %cst {dimension_numbers = #tpu.dot_dimension_numbers<[1], [1], [0], [0], [0, 0, 1, 0], [], []>} : vector<16x32xf32>, vector<16x32xf32>, vector<16x16xf32> -> vector<16x16xf32>
    %2 = arith.mulf %0, %0 : vector<16x32xf32>
    %cst_1 = arith.constant dense<0.000000e+00> : vector<16xf32>
    %3 = vector.multi_reduction <add>, %2, %cst_1 [1] : vector<16x32xf32> to vector<16xf32>
    %4 = vector.shape_cast %3 : vector<16xf32> to vector<16x1xf32>
    %cst_2 = arith.constant 1.000000e+00 : f32
    %5 = vector.broadcast %cst_2 : f32 to vector<1x32xf32>
    %cst_3 = arith.constant dense<0.000000e+00> : vector<1x16xf32>
    %6 = tpu.matmul %5, %2, %cst_3 {dimension_numbers = #tpu.dot_dimension_numbers<[1], [1], [0], [0], [0, 0, 1, 0], [], []>} : vector<1x32xf32>, vector<16x32xf32>, vector<1x16xf32> -> vector<1x16xf32>
    %7 = vector.broadcast %4 : vector<16x1xf32> to vector<16x16xf32>
    %8 = vector.broadcast %6 : vector<1x16xf32> to vector<16x16xf32>
    %9 = arith.addf %7, %8 : vector<16x16xf32>
    %cst_4 = arith.constant 2.000000e+00 : f32
    %10 = vector.broadcast %cst_4 : f32 to vector<16x16xf32>
    %11 = arith.mulf %10, %1 : vector<16x16xf32>
    %12 = arith.subf %9, %11 : vector<16x16xf32>
    %cst_5 = arith.constant 0.000000e+00 : f32
    %13 = vector.broadcast %cst_5 : f32 to vector<16x16xf32>
    %14 = arith.maximumf %12, %13 : vector<16x16xf32>
    %c0_6 = arith.constant 0 : index
    %c0_7 = arith.constant 0 : index
    %15 = vector.load %arg4[%c0_6, %c0_7] : memref<16x16xf32, #tpu.memory_space<vmem>>, vector<16x16xf32>
    tpu.vector_store %arg4[%c0_6, %c0_7], %14 {strides = array<i32>} : memref<16x16xf32, #tpu.memory_space<vmem>>, vector<16x16xf32>,
    %c0_8 = arith.constant 0 : index
    %c0_9 = arith.constant 0 : index
    %16 = vector.load %arg3[%c0_8, %c0_9] : memref<32x4xf32, #tpu.memory_space<vmem>>, vector<32x4xf32>
    %17 = tpu.iota {dimensions = array<i32: 1>} : vector<32x4xi32>
    %c0_10 = arith.constant 0 : index
    %c0_11 = arith.constant 0 : index
    %18 = vector.load %arg1[%c0_10, %c0_11] : memref<32x1xi32, #tpu.memory_space<vmem>>, vector<32x1xi32>
    %19 = vector.broadcast %18 : vector<32x1xi32> to vector<32x4xi32>
    %20 = arith.cmpi eq, %17, %19 : vector<32x4xi32>
    %21 = arith.extui %20 : vector<32x4xi1> to vector<32x4xi32>
    %22 = arith.sitofp %21 : vector<32x4xi32> to vector<32x4xf32>
    %cst_12 = arith.constant dense<0xFF800000> : vector<32xf32>
    %23 = vector.multi_reduction <maximumf>, %16, %cst_12 [1] : vector<32x4xf32> to vector<32xf32>
    %24 = vector.shape_cast %23 : vector<32xf32> to vector<32x1xf32>
    %25 = vector.broadcast %24 : vector<32x1xf32> to vector<32x4xf32>
    %26 = arith.subf %16, %25 : vector<32x4xf32>
    %27 = math.exp %26 : vector<32x4xf32>
    %cst_13 = arith.constant dense<0.000000e+00> : vector<32xf32>
    %28 = vector.multi_reduction <add>, %27, %cst_13 [1] : vector<32x4xf32> to vector<32xf32>
    %29 = vector.shape_cast %28 : vector<32xf32> to vector<32x1xf32>
    %30 = math.log %29 : vector<32x1xf32>
    %31 = arith.addf %30, %24 : vector<32x1xf32>
    %32 = arith.mulf %16, %22 : vector<32x4xf32>
    %cst_14 = arith.constant dense<0.000000e+00> : vector<32xf32>
    %33 = vector.multi_reduction <add>, %32, %cst_14 [1] : vector<32x4xf32> to vector<32xf32>
    %34 = vector.shape_cast %33 : vector<32xf32> to vector<32x1xf32>
    %35 = arith.subf %31, %34 : vector<32x1xf32>
    %cst_15 = arith.constant dense<0.000000e+00> : vector<1xf32>
    %36 = vector.multi_reduction <add>, %35, %cst_15 [0] : vector<32x1xf32> to vector<1xf32>
    %37 = vector.shape_cast %36 : vector<1xf32> to vector<1x1xf32>
    %cst_16 = arith.constant 3.125000e-02 : f32
    %38 = vector.broadcast %cst_16 : f32 to vector<1x1xf32>
    %39 = arith.mulf %37, %38 : vector<1x1xf32>
    %c0_17 = arith.constant 0 : index
    %c0_18 = arith.constant 0 : index
    %40 = vector.load %arg5[%c0_17, %c0_18] : memref<1x1xf32, #tpu.memory_space<vmem>>, vector<1x1xf32>
    tpu.vector_store %arg5[%c0_17, %c0_18], %39 {strides = array<i32>} : memref<1x1xf32, #tpu.memory_space<vmem>>, vector<1x1xf32>,
    return
  }
  func.func @transform_0(%arg0: i32) -> (i32, i32) {
    %c0_i32 = arith.constant 0 : i32
    %c0_i32_0 = arith.constant 0 : i32
    %c0_i32_1 = arith.constant 0 : i32
    return %c0_i32, %c0_i32_0 : i32, i32
  }
  func.func @transform_1(%arg0: i32) -> (i32, i32) {
    %c0_i32 = arith.constant 0 : i32
    %c0_i32_0 = arith.constant 0 : i32
    %c0_i32_1 = arith.constant 0 : i32
    return %c0_i32, %c0_i32_0 : i32, i32
  }
  func.func @transform_2(%arg0: i32) -> (i32, i32) {
    %c0_i32 = arith.constant 0 : i32
    %c0_i32_0 = arith.constant 0 : i32
    %c0_i32_1 = arith.constant 0 : i32
    return %c0_i32, %c0_i32_0 : i32, i32
  }
  func.func @transform_3(%arg0: i32) -> (i32, i32) {
    %c0_i32 = arith.constant 0 : i32
    %c0_i32_0 = arith.constant 0 : i32
    %c0_i32_1 = arith.constant 0 : i32
    return %c0_i32, %c0_i32_0 : i32, i32
  }
  func.func @transform_4(%arg0: i32) -> (i32, i32) {
    %c0_i32 = arith.constant 0 : i32
    %c0_i32_0 = arith.constant 0 : i32
    %c0_i32_1 = arith.constant 0 : i32
    return %c0_i32, %c0_i32_0 : i32, i32
  }
}

</mosaic_0001>

<llo_original>
// kernel: tpu_custom_call.1
$region0: #{tpu_custom_call.1}
  #allocation0 [shape = 'u32[]', space=smem, size = 0x4, offset = 0x4, fixed_abs, tag = 'smem constant byte address 0x4 - core index']
  #allocation1 [shape = 'u32[144,128]{1,0:T(1,128)}', space=vmem, size = 0x12000, scoped, tag = 'internal scratch']
  %s0 = inlined_call_operand.vmem [shape: s32[32,1], index: 0, kind: input, shape index: {}]
  %s1 = inlined_call_operand.vmem [shape: f32[16,32], index: 1, kind: input, shape index: {}]
  %s2 = inlined_call_operand.vmem [shape: f32[32,4], index: 2, kind: input, shape index: {}]
  %s3 = inlined_call_operand.hbm [shape: f32[16,16], index: 3, kind: output, shape index: {0}]
  %s4 = inlined_call_operand.hbm [shape: f32[1,1], index: 4, kind: output, shape index: {1}]
  %5 = xla_tuple %s3, %s4
  %s6 = sld [smem:[#allocation0]]
  $region30: #{tpu_custom_call.1} parent=0
    _
  %s8 = ssub.s32 1, %s6
  %s9 = scalar_select 0, %s8, %s6
  $region1: #{tpu_custom_call.1} parent=0
    #allocation2 [shape = 'u8[8192]{0}', space=vmem, size = 0x2000, scoped, tag = 'output window, operand 0, single buffered']
    #allocation3 [shape = 's32[1]{0}', space=sflag, size = 0x4, scoped, tag = 'scoped memory for tpu_custom_call.1']
    #allocation4 [shape = 'u8[512]{0}', space=vmem, size = 0x400, scoped, tag = 'output window, operand 1, single buffered']
    #allocation5 [shape = 's32[1]{0}', space=sflag, size = 0x4, scoped, tag = 'scoped memory for tpu_custom_call.1']
    %10 = vsyncpa [#allocation3], 0
    %11 = vsyncpa [#allocation5], 0
    // Predicated region
    $region2: #{tpu_custom_call.1} parent=1 // pred_check
      _
    $region3: #{tpu_custom_call.1} parent=1 // pred_check_branch
      %13 = sbr.rel (0) target = $region5
    $region4: #{tpu_custom_call.1} parent=1 // pred_region
      _
    $region5: #{tpu_custom_call.1} parent=1 // pred_fallthru
      _
    // Predicated region
    $region6: #{tpu_custom_call.1} parent=1 // pred_check
      _
    $region7: #{tpu_custom_call.1} parent=1 // pred_check_branch
      %15 = sbr.rel (0) target = $region9
    $region8: #{tpu_custom_call.1} parent=1 // pred_region
      _
    $region9: #{tpu_custom_call.1} parent=1 // pred_fallthru
      _
    // Predicated region
    $region10: #{tpu_custom_call.1} parent=1 // pred_check
      _
    $region11: #{tpu_custom_call.1} parent=1 // pred_check_branch
      %17 = sbr.rel (0) target = $region13
    $region12: #{tpu_custom_call.1} parent=1 // pred_region
      _
    $region13: #{tpu_custom_call.1} parent=1 // pred_fallthru
      _
    %v18 = vld [vmem:[%s1] sm:$0xff]
    %v19 = vld [vmem:[%s1 + $0x8] sm:$0xff]
    %vm20 = vcmask 261120
    %v22 = vsel %vm20, %v18, 0
    %v25 = vsel %vm20, %v19, 0
    %27 = vmatprep.subr.mxu0 0.0
    %28 = vmatpush1.xpose.msra.mxu0 0.0
    %29 = vmatprep.subr.mxu0 0.0
    %30 = vmatpush1.xpose.msra.mxu0 0.0
    %31 = vmatprep.subr.mxu0 0.0
    %32 = vmatpush1.xpose.msra.mxu0 0.0
    %33 = vmatprep.subr.mxu0 0.0
    %34 = vmatpush1.xpose.msra.mxu0 0.0
    %35 = vmatprep.subr.mxu0 0.0
    %36 = vmatpush1.xpose.msra.mxu0 0.0
    %37 = vmatprep.subr.mxu0 0.0
    %38 = vmatpush1.xpose.msra.mxu0 0.0
    %39 = vmatprep.subr.mxu0 0.0
    %40 = vmatpush1.xpose.msra.mxu0 0.0
    %41 = vmatprep.subr.mxu0 0.0
    %42 = vmatpush1.xpose.msra.mxu0 0.0
    %43 = vmatprep.subr.mxu0 0.0
    %44 = vmatpush1.xpose.msra.mxu0 0.0
    %45 = vmatprep.subr.mxu0 0.0
    %46 = vmatpush1.xpose.msra.mxu0 0.0
    %47 = vmatprep.subr.mxu0 0.0
    %48 = vmatpush1.xpose.msra.mxu0 0.0
    %49 = vmatprep.subr.mxu0 0.0
    %50 = vmatpush1.xpose.msra.mxu0 0.0
    %51 = vmatprep.subr.mxu0 0.0
    %52 = vmatpush1.xpose.msra.mxu0 0.0
    %53 = vmatprep.subr.mxu0 0.0
    %54 = vmatpush1.xpose.msra.mxu0 0.0
    %55 = vmatprep.subr.mxu0 0.0
    %56 = vmatpush1.xpose.msra.mxu0 %v25
    %57 = vmatprep.subr.mxu0 0.0
    %58 = vmatpush1.xpose.msra.mxu0 %v22
    %59 = vmatprep.subr.mxu0 0.0
    %60 = vmatpush2.xpose.msra.mxu0 0.0
    %61 = vmatprep.subr.mxu0 0.0
    %62 = vmatpush2.xpose.msra.mxu0 0.0
    %63 = vmatprep.subr.mxu0 0.0
    %64 = vmatpush2.xpose.msra.mxu0 0.0
    %65 = vmatprep.subr.mxu0 0.0
    %66 = vmatpush2.xpose.msra.mxu0 0.0
    %67 = vmatprep.subr.mxu0 0.0
    %68 = vmatpush2.xpose.msra.mxu0 0.0
    %69 = vmatprep.subr.mxu0 0.0
    %70 = vmatpush2.xpose.msra.mxu0 0.0
    %71 = vmatprep.subr.mxu0 0.0
    %72 = vmatpush2.xpose.msra.mxu0 0.0
    %73 = vmatprep.subr.mxu0 0.0
    %74 = vmatpush2.xpose.msra.mxu0 0.0
    %75 = vmatprep.subr.mxu0 0.0
    %76 = vmatpush2.xpose.msra.mxu0 0.0
    %77 = vmatprep.subr.mxu0 0.0
    %78 = vmatpush2.xpose.msra.mxu0 0.0
    %79 = vmatprep.subr.mxu0 0.0
    %80 = vmatpush2.xpose.msra.mxu0 0.0
    %81 = vmatprep.subr.mxu0 0.0
    %82 = vmatpush2.xpose.msra.mxu0 0.0
    %83 = vmatprep.subr.mxu0 0.0
    %84 = vmatpush2.xpose.msra.mxu0 0.0
    %85 = vmatprep.subr.mxu0 0.0
    %86 = vmatpush2.xpose.msra.mxu0 0.0
    %87 = vmatprep.subr.mxu0 0.0
    %88 = vmatpush2.xpose.msra.mxu0 0.0
    %89 = vmatprep.subr.mxu0 0.0
    %90 = vmatpush2.xpose.msra.mxu0 0.0
    %91 = vmatprep.mubr.f32.mxu0 0.0
    %92 = vmatmul.mubr.f32.gmra.mxu0 %v22
    %v93 = vpop.f32.mrf.mxu0
    %v94 = vadd.f32 0.0, %v93
    %v95 = vpop.f32.mrf.mxu0
    %96 = vmatprep.mubr.f32.mxu0 0.0
    %97 = vmatmul.mubr.f32.gmra.mxu0 %v25
    %v98 = vpop.f32.mrf.mxu0
    %v99 = vadd.f32 0.0, %v98
    %v100 = vpop.f32.mrf.mxu0
    %101 = vdwg.mxu0
    %v102 = vmul.f32 %v18, %v18
    %v103 = vmul.f32 %v19, %v19
    %v104 = vsel %vm20, %v102, 0.0
    %105 = vadd.xlane.f32.xlu0 %v104
    %v106 = vpop.xlane.xlu0 %105
    %v107 = vsel %vm20, %v103, 0.0
    %108 = vadd.xlane.f32.xlu0 %v107
    %v109 = vpop.xlane.xlu0 %108
    %v111 = vsel %vm20, 1.0, 0
    %v114 = vsel %vm20, %v102, 0
    %v117 = vsel %vm20, %v103, 0
    %119 = vmatprep.subr.mxu0 0.0
    %120 = vmatpush1.xpose.msra.mxu0 0.0
    %121 = vmatprep.subr.mxu0 0.0
    %122 = vmatpush1.xpose.msra.mxu0 0.0
    %123 = vmatprep.subr.mxu0 0.0
    %124 = vmatpush1.xpose.msra.mxu0 0.0
    %125 = vmatprep.subr.mxu0 0.0
    %126 = vmatpush1.xpose.msra.mxu0 0.0
    %127 = vmatprep.subr.mxu0 0.0
    %128 = vmatpush1.xpose.msra.mxu0 0.0
    %129 = vmatprep.subr.mxu0 0.0
    %130 = vmatpush1.xpose.msra.mxu0 0.0
    %131 = vmatprep.subr.mxu0 0.0
    %132 = vmatpush1.xpose.msra.mxu0 0.0
    %133 = vmatprep.subr.mxu0 0.0
    %134 = vmatpush1.xpose.msra.mxu0 0.0
    %135 = vmatprep.subr.mxu0 0.0
    %136 = vmatpush1.xpose.msra.mxu0 0.0
    %137 = vmatprep.subr.mxu0 0.0
    %138 = vmatpush1.xpose.msra.mxu0 0.0
    %139 = vmatprep.subr.mxu0 0.0
    %140 = vmatpush1.xpose.msra.mxu0 0.0
    %141 = vmatprep.subr.mxu0 0.0
    %142 = vmatpush1.xpose.msra.mxu0 0.0
    %143 = vmatprep.subr.mxu0 0.0
    %144 = vmatpush1.xpose.msra.mxu0 0.0
    %145 = vmatprep.subr.mxu0 0.0
    %146 = vmatpush1.xpose.msra.mxu0 0.0
    %147 = vmatprep.subr.mxu0 0.0
    %148 = vmatpush1.xpose.msra.mxu0 %v117
    %149 = vmatprep.subr.mxu0 0.0
    %150 = vmatpush1.xpose.msra.mxu0 %v114
    %151 = vmatprep.subr.mxu0 0.0
    %152 = vmatpush2.xpose.msra.mxu0 0.0
    %153 = vmatprep.subr.mxu0 0.0
    %154 = vmatpush2.xpose.msra.mxu0 0.0
    %155 = vmatprep.subr.mxu0 0.0
    %156 = vmatpush2.xpose.msra.mxu0 0.0
    %157 = vmatprep.subr.mxu0 0.0
    %158 = vmatpush2.xpose.msra.mxu0 0.0
    %159 = vmatprep.subr.mxu0 0.0
    %160 = vmatpush2.xpose.msra.mxu0 0.0
    %161 = vmatprep.subr.mxu0 0.0
    %162 = vmatpush2.xpose.msra.mxu0 0.0
    %163 = vmatprep.subr.mxu0 0.0
    %164 = vmatpush2.xpose.msra.mxu0 0.0
    %165 = vmatprep.subr.mxu0 0.0
    %166 = vmatpush2.xpose.msra.mxu0 0.0
    %167 = vmatprep.subr.mxu0 0.0
    %168 = vmatpush2.xpose.msra.mxu0 0.0
    %169 = vmatprep.subr.mxu0 0.0
    %170 = vmatpush2.xpose.msra.mxu0 0.0
    %171 = vmatprep.subr.mxu0 0.0
    %172 = vmatpush2.xpose.msra.mxu0 0.0
    %173 = vmatprep.subr.mxu0 0.0
    %174 = vmatpush2.xpose.msra.mxu0 0.0
    %175 = vmatprep.subr.mxu0 0.0
    %176 = vmatpush2.xpose.msra.mxu0 0.0
    %177 = vmatprep.subr.mxu0 0.0
    %178 = vmatpush2.xpose.msra.mxu0 0.0
    %179 = vmatprep.subr.mxu0 0.0
    %180 = vmatpush2.xpose.msra.mxu0 0.0
    %181 = vmatprep.subr.mxu0 0.0
    %182 = vmatpush2.xpose.msra.mxu0 0.0
    %183 = vmatprep.mubr.f32.mxu0 0.0
    %184 = vmatmul.mubr.f32.gmra.mxu0 %v111
    %v185 = vpop.f32.mrf.mxu0
    %v186 = vadd.f32 0.0, %v185
    %v187 = vpop.f32.mrf.mxu0
    %188 = vdwg.mxu0
    %v189 = vlaneseq
    %v190 = vshrl.u32 %v189, 7
    %v191 = vsub.s32 0, %v190
    %v192 = vrot.slane %v186, %v191
    %v193 = vadd.f32 %v106, %v192
    %v194 = vadd.f32 %v109, %v192
    %v195 = vmul.f32 %v94, 2.0
    %v196 = vmul.f32 %v99, 2.0
    %v197 = vsub.f32 %v193, %v195
    %v198 = vsub.f32 %v194, %v196
    %v199 = vmax.f32 %v197, 0.0
    %v200 = vmax.f32 %v198, 0.0
    %vm201 = vcmask 130048
    %202 = vst.msk [vmem:[#allocation2] sm:$0xff] %vm201, %v199
    %203 = vst.msk [vmem:[#allocation2 + $0x8] sm:$0xff] %vm201, %v200
    %v204 = vld [vmem:[%s2] sm:$0xff]
    %v205 = vld [vmem:[%s2 + $0x8] sm:$0xff]
    %v206 = vld [vmem:[%s2 + $0x10] sm:$0xff]
    %v207 = vld [vmem:[%s2 + $0x18] sm:$0xff]
    %v208 = vlaneseq
    %v209 = vand.u32 %v208, 127
    %v210 = vld [vmem:[%s0] sm:$0xff]
    %v211 = vld [vmem:[%s0 + $0x8] sm:$0xff]
    %v212 = vld [vmem:[%s0 + $0x10] sm:$0xff]
    %v213 = vld [vmem:[%s0 + $0x18] sm:$0xff]
    %214 = vset.pattern.permute.xlu0 0
    %215 = vperm.xlu0 %214, %v210
    %v216 = vpop.permute.xlu0 %215
    %217 = vset.pattern.permute.xlu0 0
    %218 = vperm.xlu0 %217, %v211
    %v219 = vpop.permute.xlu0 %218
    %220 = vset.pattern.permute.xlu0 0
    %221 = vperm.xlu0 %220, %v212
    %v222 = vpop.permute.xlu0 %221
    %223 = vset.pattern.permute.xlu0 0
    %224 = vperm.xlu0 %223, %v213
    %v225 = vpop.permute.xlu0 %224
    %vm226 = vcmp.eq.s32.totalorder %v209, %v216
    %vm227 = vcmp.eq.s32.totalorder %v209, %v219
    %vm228 = vcmp.eq.s32.totalorder %v209, %v222
    %vm229 = vcmp.eq.s32.totalorder %v209, %v225
    %v230 = vsel %vm226, 1, 0
    %v231 = vsel %vm227, 1, 0
    %v232 = vsel %vm228, 1, 0
    %v233 = vsel %vm229, 1, 0
    %v234 = vcvt.s32.f32 %v230
    %v235 = vcvt.s32.f32 %v231
    %v236 = vcvt.s32.f32 %v232
    %v237 = vcvt.s32.f32 %v233
    %vm238 = vcmask 31744
    %v239 = vsel %vm238, %v204, -inf
    %240 = vmax.xlane.f32.xlu0 %v239
    %v241 = vpop.xlane.xlu0 %240
    %v242 = vsel %vm238, %v205, -inf
    %243 = vmax.xlane.f32.xlu0 %v242
    %v244 = vpop.xlane.xlu0 %243
    %v245 = vsel %vm238, %v206, -inf
    %246 = vmax.xlane.f32.xlu0 %v245
    %v247 = vpop.xlane.xlu0 %246
    %v248 = vsel %vm238, %v207, -inf
    %249 = vmax.xlane.f32.xlu0 %v248
    %v250 = vpop.xlane.xlu0 %249
    %v251 = vsub.f32 %v204, %v241
    %v252 = vsub.f32 %v205, %v244
    %v253 = vsub.f32 %v206, %v247
    %v254 = vsub.f32 %v207, %v250
    %v255 = vmul.f32 %v251, 1.442695
    %v256 = vpow.pop %v255
    %v257 = vmul.f32 %v252, 1.442695
    %v258 = vpow.pop %v257
    %v259 = vmul.f32 %v253, 1.442695
    %v260 = vpow.pop %v259
    %v261 = vmul.f32 %v254, 1.442695
    %v262 = vpow.pop %v261
    %v263 = vsel %vm238, %v256, 0.0
    %264 = vadd.xlane.f32.xlu0 %v263
    %v265 = vpop.xlane.xlu0 %264
    %v266 = vsel %vm238, %v258, 0.0
    %267 = vadd.xlane.f32.xlu0 %v266
    %v268 = vpop.xlane.xlu0 %267
    %v269 = vsel %vm238, %v260, 0.0
    %270 = vadd.xlane.f32.xlu0 %v269
    %v271 = vpop.xlane.xlu0 %270
    %v272 = vsel %vm238, %v262, 0.0
    %273 = vadd.xlane.f32.xlu0 %v272
    %v274 = vpop.xlane.xlu0 %273
    %v275 = vlog2.pop %v265
    %v276 = vmul.f32 %v275, 0.6931472
    %v277 = vlog2.pop %v268
    %v278 = vmul.f32 %v277, 0.6931472
    %v279 = vlog2.pop %v271
    %v280 = vmul.f32 %v279, 0.6931472
    %v281 = vlog2.pop %v274
    %v282 = vmul.f32 %v281, 0.6931472
    %v283 = vadd.f32 %v276, %v241
    %v284 = vadd.f32 %v278, %v244
    %v285 = vadd.f32 %v280, %v247
    %v286 = vadd.f32 %v282, %v250
    %v287 = vmul.f32 %v204, %v234
    %v288 = vmul.f32 %v205, %v235
    %v289 = vmul.f32 %v206, %v236
    %v290 = vmul.f32 %v207, %v237
    %v291 = vsel %vm238, %v287, 0.0
    %292 = vadd.xlane.f32.xlu0 %v291
    %v293 = vpop.xlane.xlu0 %292
    %v294 = vsel %vm238, %v288, 0.0
    %295 = vadd.xlane.f32.xlu0 %v294
    %v296 = vpop.xlane.xlu0 %295
    %v297 = vsel %vm238, %v289, 0.0
    %298 = vadd.xlane.f32.xlu0 %v297
    %v299 = vpop.xlane.xlu0 %298
    %v300 = vsel %vm238, %v290, 0.0
    %301 = vadd.xlane.f32.xlu0 %v300
    %v302 = vpop.xlane.xlu0 %301
    %v303 = vsub.f32 %v283, %v293
    %v304 = vsub.f32 %v284, %v296
    %v305 = vsub.f32 %v285, %v299
    %v306 = vsub.f32 %v286, %v302
    %v307 = vadd.f32 %v303, %v304
    %v308 = vadd.f32 %v307, %v305
    %v309 = vadd.f32 %v308, %v306
    %v310 = vrot.slane %v309, 4
    %v311 = vadd.f32 %v309, %v310
    %v312 = vrot.slane %v311, 2
    %v313 = vadd.f32 %v311, %v312
    %v314 = vrot.slane %v313, 1
    %v315 = vadd.f32 %v313, %v314
    %v316 = vmul.f32 %v315, 0.03125
    %vm317 = vcmask 0
    %318 = vst.msk [vmem:[#allocation4] sm:$0x1] %vm317, %v316
    // Predicated region
    $region14: #{tpu_custom_call.1} parent=1 // pred_check
      _
    $region15: #{tpu_custom_call.1} parent=1 // pred_check_branch
      %320 = sbr.rel (0) target = $region17
    $region16: #{tpu_custom_call.1} parent=1 // pred_region
      %s322 = ssub.s32 256, 256
      %323 = vsyncadd [#allocation3], %s322
      %s324 = sshll.u32 [#allocation2], 4
      %s325 = int_to_ptr.vmem [resolvable:$true] %s324
      %330 = dma.vmem_to_hbm [thread:$0]  %s325, 256, %s3, [#allocation3], 128, 128, 8
    $region17: #{tpu_custom_call.1} parent=1 // pred_fallthru
      _
    // Predicated region
    $region18: #{tpu_custom_call.1} parent=1 // pred_check
      _
    $region19: #{tpu_custom_call.1} parent=1 // pred_check_branch
      %332 = sbr.rel (0) target = $region21
    $region20: #{tpu_custom_call.1} parent=1 // pred_region
      %s334 = ssub.s32 16, 16
      %335 = vsyncadd [#allocation5], %s334
      %s337 = sshll.u32 [#allocation4], 4
      %s338 = int_to_ptr.vmem [resolvable:$true] %s337
      %340 = dma.vmem_to_hbm [thread:$0]  %s338, 16, %s4, [#allocation5]
    $region21: #{tpu_custom_call.1} parent=1 // pred_fallthru
      _
    // Predicated region
    $region22: #{tpu_custom_call.1} parent=1 // pred_check
      _
    $region23: #{tpu_custom_call.1} parent=1 // pred_check_branch
      %342 = sbr.rel (0) target = $region25
    $region24: #{tpu_custom_call.1} parent=1 // pred_region
      %343 = dma.done [#allocation3], 256
    $region25: #{tpu_custom_call.1} parent=1 // pred_fallthru
      _
    // Predicated region
    $region26: #{tpu_custom_call.1} parent=1 // pred_check
      _
    $region27: #{tpu_custom_call.1} parent=1 // pred_check_branch
      %345 = sbr.rel (0) target = $region29
    $region28: #{tpu_custom_call.1} parent=1 // pred_region
      %346 = dma.done [#allocation5], 16
    $region29: #{tpu_custom_call.1} parent=1 // pred_fallthru
      _
    %347 = vsyncpa [#allocation3], 1
    %348 = vsyncpa [#allocation5], 1

</llo_original>
